<compile_context>
chip_gen: v5e
topology: v5e:2x2
jax: 0.10.0
libtpu: 0.0.40
codegen_flags: <defaults>
</compile_context>

<pallas_src>
import functools

import jax
import jax.numpy as jnp
from jax.experimental import pallas as pl
from jax.experimental.pallas import tpu as pltpu

FILTER_SIZES = (2, 3, 4)
FILTER_NUM = 32
NUM_CLASSES = 36

KW = max(FILTER_SIZES)        # fused window length (smaller filters zero-padded)
MIN_F = min(FILTER_SIZES)
C_PAD = 128                   # 3 * FILTER_NUM = 96 conv channels, lane-padded to 128
NOUT_PAD = 128                # 36 classes, lane-padded to 128 (sliced in wrapper)
NEG_INF = -1e30


def textcnn_kernel(x_ref, w_ref, b_ref, mask_ref, fcw_ref, fcb_ref, o_ref,
                   acc_ref, *, first_mask_chunk, use_im2col):
    t = pl.program_id(1)
    n_t = pl.num_programs(1)

    # --- init running max on the first time chunk of each batch tile ---------
    @pl.when(t == 0)
    def _():
        acc_ref[...] = jnp.full(acc_ref.shape, NEG_INF, acc_ref.dtype)

    xc = x_ref[...]                                   # (TB, LC, E) bf16 chunk+halo
    TB, LC, E = xc.shape
    LT = LC - (KW - 1)                                # conv positions this chunk

    # --- conv over this time chunk (one or KW MXU matmuls, f32 accumulate) ---
    if use_im2col:
        # small E: lane-concat KW shifted windows -> single (TB*LT, KW*E) matmul
        win = [xc[:, k:k + LT, :] for k in range(KW)]
        im2col = jnp.concatenate(win, axis=-1).reshape(TB * LT, KW * E)
        conv = jnp.dot(im2col, w_ref[...], preferred_element_type=jnp.float32)
    else:
        # realistic E: KW-step accumulation, no 4x data duplication in VMEM
        conv = jnp.dot(xc[:, 0:LT, :].reshape(TB * LT, E), w_ref[0],
                       preferred_element_type=jnp.float32)
        for k in range(1, KW):
            conv = conv + jnp.dot(xc[:, k:k + LT, :].reshape(TB * LT, E),
                                  w_ref[k], preferred_element_type=jnp.float32)
    conv = conv.reshape(TB, LT, C_PAD)                # free: LT % 8 == 0

    # --- running max over time; mask only chunks containing invalid rows -----
    if first_mask_chunk <= 0:
        acc_ref[...] = jnp.maximum(
            acc_ref[...], jnp.max(conv + mask_ref[...][None, :, :], axis=1))
    else:
        @pl.when(t < first_mask_chunk)
        def _():
            acc_ref[...] = jnp.maximum(acc_ref[...], jnp.max(conv, axis=1))

        @pl.when(t >= first_mask_chunk)
        def _():
            acc_ref[...] = jnp.maximum(
                acc_ref[...], jnp.max(conv + mask_ref[...][None, :, :], axis=1))

    # --- epilogue (bias + ReLU + fc + log_softmax) only on the last chunk ----
    # (max-pool BEFORE bias+ReLU: bias is constant over time, ReLU monotone)
    @pl.when(t == n_t - 1)
    def _():
        feats = jnp.maximum(acc_ref[...] + b_ref[...], 0.0)       # (TB, C_PAD) f32
        logits = jnp.dot(feats, fcw_ref[...],
                         preferred_element_type=jnp.float32) + fcb_ref[...]
        cols = jax.lax.broadcasted_iota(jnp.int32, logits.shape, 1)
        logits = jnp.where(cols < NUM_CLASSES, logits, NEG_INF)   # kill padded classes
        m = jnp.max(logits, axis=1, keepdims=True)
        z = logits - m
        lse = jnp.log(jnp.sum(jnp.exp(z), axis=1, keepdims=True))
        o_ref[...] = (z - lse).astype(o_ref.dtype)


def _cdiv(a, b):
    return -(-a // b)


def _round_up(a, m):
    return _cdiv(a, m) * m


def _fuse_conv_params(conv_ws, conv_bs, E, stacked):
    """Pack the 3 conv banks into one fused weight + (1, C_PAD) bias.

    stacked=True  -> (KW, E, C_PAD)  (KW-step matmul path, E >= 64)
    stacked=False -> (KW*E, C_PAD)   (im2col matmul path, small E)
    Filters shorter than KW are zero-padded along the window dim; the padded
    x rows they multiply are zero as well.
    """
    C = FILTER_NUM
    w = jnp.zeros((KW, E, C_PAD), jnp.float32)
    b = jnp.zeros((1, C_PAD), jnp.float32)
    for g, (fsz, wg, bg) in enumerate(zip(FILTER_SIZES, conv_ws, conv_bs)):
        w = w.at[:fsz, :, g * C:(g + 1) * C].set(wg)     # wg: (fsz, E, C)
        b = b.at[:, g * C:(g + 1) * C].set(bg)
    if not stacked:
        w = w.reshape(KW * E, C_PAD)
    return w.astype(jnp.bfloat16), b


def _build_time_mask(S, L_pad):
    """(L_pad, C_PAD) additive mask: 0 on valid conv positions, -1e30 elsewhere."""
    C = FILTER_NUM
    valid_len = jnp.full((C_PAD,), S - MIN_F + 1, jnp.int32)
    for g, fsz in enumerate(FILTER_SIZES):
        valid_len = valid_len.at[g * C:(g + 1) * C].set(S - fsz + 1)
    pos = jnp.arange(L_pad, dtype=jnp.int32)[:, None]
    return jnp.where(pos < valid_len[None, :], 0.0, NEG_INF).astype(jnp.float32)


def _vmem_limit_bytes(TB, LC, LT, E, use_im2col):
    """Per-grid-step VMEM footprint (input block, conv chunk, weights, scratch),
    with 2x headroom, clamped to [16 MiB, 64 MiB] (valid on v5e/v6e/v7x)."""
    x_blk = 2 * TB * LC * E * 2                         # bf16 chunk, double-buffered
    conv = TB * LT * C_PAD * 4                          # f32 conv chunk
    interm = TB * LT * (KW * E if use_im2col else E) * 2
    w = 2 * KW * E * C_PAD * 2
    fc = 2 * (C_PAD * NOUT_PAD * 4 + NOUT_PAD * 4 + C_PAD * 4)
    mask = 2 * LT * C_PAD * 4
    other = TB * C_PAD * 4 + 2 * TB * NOUT_PAD * 4
    need = x_blk + conv + interm + w + fc + mask + other
    return int(min(max(2 * need + (4 << 20), 16 << 20), 64 << 20))


def textcnn_forward(x_tokens, emb, conv_ws, conv_bs, fc_w, fc_b,
                    *, max_batch_tile=32, max_time_tile=256):
    """x_tokens: (S, B) int32 token ids (torchtext seq-first convention)."""
    S, B = x_tokens.shape
    E = emb.shape[1]
    assert S >= KW, "sequence must be at least as long as the largest filter"
    L = S - MIN_F + 1                       # positions evaluated for every filter

    # --- tiling ---------------------------------------------------------------
    max_time_tile = _round_up(max(max_time_tile, 8), 8)
    LT = min(_round_up(L, 8), max_time_tile)       # time chunk, multiple of 8
    NT = _cdiv(L, LT)
    L_pad = NT * LT
    LC = LT + KW - 1                               # chunk + halo rows of x
    S_need = L_pad + KW - 1                        # padded sequence length

    n_bprog = 1 if B <= 1 else max(2, _cdiv(B, max_batch_tile))
    TB = _round_up(_cdiv(B, n_bprog), 8)           # sublane-friendly batch tile
    B_pad = n_bprog * TB

    use_im2col = E < 64
    first_mask_chunk = (S - KW + 1) // LT          # first chunk with invalid rows

    # --- embedding gather + overlapping time chunks (XLA glue) ---------------
    # TODO(synk): fuse this gather into the kernel (scalar-prefetched token ids
    # + DMA gather from the embedding table in HBM) to drop an HBM round-trip.
    tok = x_tokens.T                                            # (B, S)
    if B_pad > B:
        tok = jnp.pad(tok, ((0, B_pad - B), (0, 0)))
    x_emb = jnp.take(emb.astype(jnp.bfloat16), tok, axis=0)     # (B_pad, S, E)
    x_emb = jnp.pad(x_emb, ((0, 0), (0, S_need - S), (0, 0)))
    row_idx = (jnp.arange(NT, dtype=jnp.int32)[:, None] * LT
               + jnp.arange(LC, dtype=jnp.int32)[None, :])      # (NT, LC) halo'd rows
    x_chunks = x_emb[:, row_idx, :]                             # (B_pad, NT, LC, E)

    # --- fused parameters -----------------------------------------------------
    w_fused, b_fused = _fuse_conv_params(conv_ws, conv_bs, E,
                                         stacked=not use_im2col)
    mask = _build_time_mask(S, L_pad)
    fcw_p = (jnp.zeros((C_PAD, NOUT_PAD), jnp.float32)
             .at[: len(FILTER_SIZES) * FILTER_NUM, :NUM_CLASSES].set(fc_w))
    fcb_p = jnp.zeros((1, NOUT_PAD), jnp.float32).at[:, :NUM_CLASSES].set(fc_b)

    w_spec = (pl.BlockSpec((KW * E, C_PAD), lambda i, t: (0, 0)) if use_im2col
              else pl.BlockSpec((KW, E, C_PAD), lambda i, t: (0, 0, 0)))

    kernel = functools.partial(textcnn_kernel,
                               first_mask_chunk=first_mask_chunk,
                               use_im2col=use_im2col)

    out = pl.pallas_call(
        kernel,
        out_shape=jax.ShapeDtypeStruct((B_pad, NOUT_PAD), jnp.float32),
        grid_spec=pltpu.PrefetchScalarGridSpec(
            num_scalar_prefetch=0,
            grid=(B_pad // TB, NT),                              # (batch, time)
            in_specs=[
                pl.BlockSpec((TB, None, LC, E), lambda i, t: (i, t, 0, 0)),  # x chunks
                w_spec,                                                      # conv W
                pl.BlockSpec((1, C_PAD), lambda i, t: (0, 0)),               # conv b
                pl.BlockSpec((LT, C_PAD), lambda i, t: (t, 0)),              # time mask
                pl.BlockSpec((C_PAD, NOUT_PAD), lambda i, t: (0, 0)),        # fc W
                pl.BlockSpec((1, NOUT_PAD), lambda i, t: (0, 0)),            # fc b
            ],
            out_specs=pl.BlockSpec((TB, NOUT_PAD), lambda i, t: (i, 0)),
            scratch_shapes=[pltpu.VMEM((TB, C_PAD), jnp.float32)],           # running max
        ),
        compiler_params=pltpu.CompilerParams(
            dimension_semantics=("parallel", "arbitrary"),
            vmem_limit_bytes=_vmem_limit_bytes(TB, LC, LT, E, use_im2col),
        ),
    )(x_chunks, w_fused, b_fused, mask, fcw_p, fcb_p)

    return out[:B, :NUM_CLASSES]


def textcnn_reference(x_tokens, emb, conv_ws, conv_bs, fc_w, fc_b):
    """Pure-JAX f32 reference matching the PyTorch forward."""
    x = emb[x_tokens]                               # (S, B, E)
    x = jnp.transpose(x, (1, 0, 2))                 # (B, S, E)
    feats = []
    for fsz, w, b in zip(FILTER_SIZES, conv_ws, conv_bs):
        Lf = x.shape[1] - fsz + 1
        acc = jnp.zeros((x.shape[0], Lf, FILTER_NUM), jnp.float32)
        for k in range(fsz):
            acc = acc + jnp.einsum('ble,ec->blc', x[:, k:k + Lf, :], w[k])
        acc = jax.nn.relu(acc + b)
        feats.append(jnp.max(acc, axis=1))
    feats = jnp.concatenate(feats, axis=1)
    logits = feats @ fc_w + fc_b
    return jax.nn.log_softmax(logits, axis=1)


def _make_inputs(key, vocab, E, S, B):
    keys = jax.random.split(key, 10)
    emb = jax.random.normal(keys[0], (vocab, E), jnp.float32) * 0.1
    conv_ws, conv_bs = [], []
    for i, fsz in enumerate(FILTER_SIZES):
        # PyTorch Conv2d weight is (C_out, 1, fsz, E); stored here as (fsz, E, C_out)
        w = jax.random.normal(keys[1 + i], (fsz, E, FILTER_NUM),
                              jnp.float32) * (1.0 / (fsz * E) ** 0.5)
        b = jax.random.normal(keys[4 + i], (1, FILTER_NUM), jnp.float32) * 0.01
        conv_ws.append(w)
        conv_bs.append(b)
    fc_w = jax.random.normal(keys[7], (len(FILTER_SIZES) * FILTER_NUM, NUM_CLASSES),
                             jnp.float32) * 0.05
    fc_b = jax.random.normal(keys[8], (1, NUM_CLASSES), jnp.float32) * 0.01
    x_tokens = jax.random.randint(keys[9], (S, B), 0, vocab, jnp.int32)
    return x_tokens, emb, conv_ws, conv_bs, fc_w, fc_b


if __name__ == "__main__":
    key = jax.random.PRNGKey(0)
    k1, k2 = jax.random.split(key)

    # Config 1: small E -> fused im2col matmul path, single time chunk.
    args1 = _make_inputs(k1, 100, 32, 8, 2)          # vocab, E, S, B
    out1 = textcnn_forward(*args1)
    jax.block_until_ready(out1)
    assert out1.shape == (2, NUM_CLASSES)
    assert bool(jnp.isfinite(out1).all())
    ref1 = textcnn_reference(*args1)
    assert jnp.allclose(out1, ref1, atol=3e-2, rtol=3e-2), "mismatch (im2col path)"

    # Config 2: E >= 64 -> KW-step matmul path, 2 time chunks, padded odd batch.
    args2 = _make_inputs(k2, 50, 128, 11, 3)
    out2 = textcnn_forward(*args2, max_time_tile=8)
    jax.block_until_ready(out2)
    assert out2.shape == (3, NUM_CLASSES)
    assert bool(jnp.isfinite(out2).all())
    ref2 = textcnn_reference(*args2)
    assert jnp.allclose(out2, ref2, atol=3e-2, rtol=3e-2), "mismatch (KW-step path)"

    print("KERNEL_OK")
</pallas_src>

<mosaic_0001>
module attributes {stable_mosaic.version = 11 : i64} {
  func.func @textcnn_kernel(%arg0: i32, %arg1: i32, %arg2: memref<8x1x11x32xbf16, #tpu.memory_space<vmem>>, %arg3: memref<128x128xbf16, #tpu.memory_space<vmem>>, %arg4: memref<1x128xf32, #tpu.memory_space<vmem>>, %arg5: memref<8x128xf32, #tpu.memory_space<vmem>>, %arg6: memref<128x128xf32, #tpu.memory_space<vmem>>, %arg7: memref<1x128xf32, #tpu.memory_space<vmem>>, %arg8: memref<8x128xf32, #tpu.memory_space<vmem>>, %arg9: memref<8x128xf32, #tpu.memory_space<vmem>>) attributes {dimension_semantics = [#tpu.dimension_semantics<parallel>, #tpu.dimension_semantics<arbitrary>], iteration_bounds = array<i64: 2, 1>, scalar_prefetch = 0 : i64, scratch_operands = 1 : i64, tpu.core_type = #tpu.core_type<tc>, window_params = [{transform_indices = @transform_0, window_bounds = array<i64: 8, 1, 11, 32>}, {pipeline_mode = #tpu.pipeline_mode<synchronous>, transform_indices = @transform_1, window_bounds = array<i64: 128, 128>}, {pipeline_mode = #tpu.pipeline_mode<synchronous>, transform_indices = @transform_2, window_bounds = array<i64: 1, 128>}, {transform_indices = @transform_3, window_bounds = array<i64: 8, 128>}, {pipeline_mode = #tpu.pipeline_mode<synchronous>, transform_indices = @transform_4, window_bounds = array<i64: 128, 128>}, {pipeline_mode = #tpu.pipeline_mode<synchronous>, transform_indices = @transform_5, window_bounds = array<i64: 1, 128>}, {transform_indices = @transform_6, window_bounds = array<i64: 8, 128>}]} {
    %c0_i32 = arith.constant 0 : i32
    %0 = arith.cmpi eq, %arg1, %c0_i32 : i32
    %1 = arith.extui %0 : i1 to i32
    %c0_i32_0 = arith.constant 0 : i32
    %2 = arith.cmpi ne, %1, %c0_i32_0 : i32
    scf.if %2 {
      %cst_15 = arith.constant -1.000000e+30 : f32
      %25 = vector.broadcast %cst_15 : f32 to vector<8x128xf32>
      %c0_16 = arith.constant 0 : index
      %c0_17 = arith.constant 0 : index
      %26 = vector.load %arg9[%c0_16, %c0_17] : memref<8x128xf32, #tpu.memory_space<vmem>>, vector<8x128xf32>
      tpu.vector_store %arg9[%c0_16, %c0_17], %25 {strides = array<i32>} : memref<8x128xf32, #tpu.memory_space<vmem>>, vector<8x128xf32>,
    } else {
    }
    %c0 = arith.constant 0 : index
    %c0_1 = arith.constant 0 : index
    %c0_2 = arith.constant 0 : index
    %c0_3 = arith.constant 0 : index
    %3 = vector.load %arg2[%c0, %c0_1, %c0_2, %c0_3] : memref<8x1x11x32xbf16, #tpu.memory_space<vmem>>, vector<8x1x11x32xbf16>
    %4 = vector.shape_cast %3 : vector<8x1x11x32xbf16> to vector<8x11x32xbf16>
    %5 = vector.extract_strided_slice %4 {offsets = [0, 0, 0], sizes = [8, 8, 32], strides = [1, 1, 1]} : vector<8x11x32xbf16> to vector<8x8x32xbf16>
    %6 = vector.extract_strided_slice %4 {offsets = [0, 1, 0], sizes = [8, 8, 32], strides = [1, 1, 1]} : vector<8x11x32xbf16> to vector<8x8x32xbf16>
    %7 = vector.extract_strided_slice %4 {offsets = [0, 2, 0], sizes = [8, 8, 32], strides = [1, 1, 1]} : vector<8x11x32xbf16> to vector<8x8x32xbf16>
    %8 = vector.extract_strided_slice %4 {offsets = [0, 3, 0], sizes = [8, 8, 32], strides = [1, 1, 1]} : vector<8x11x32xbf16> to vector<8x8x32xbf16>
    %9 = tpu.concatenate %5, %6, %7, %8 in 2 : vector<8x8x32xbf16>, vector<8x8x32xbf16>, vector<8x8x32xbf16>, vector<8x8x32xbf16> -> vector<8x8x128xbf16>
    %10 = vector.shape_cast %9 : vector<8x8x128xbf16> to vector<64x128xbf16>
    %c0_4 = arith.constant 0 : index
    %c0_5 = arith.constant 0 : index
    %11 = vector.load %arg3[%c0_4, %c0_5] : memref<128x128xbf16, #tpu.memory_space<vmem>>, vector<128x128xbf16>
    %cst = arith.constant dense<0.000000e+00> : vector<64x128xf32>
    %12 = tpu.matmul %10, %11, %cst {dimension_numbers = #tpu.dot_dimension_numbers<[1], [0], [0], [1], [0, 0, 1, 1], [], []>} : vector<64x128xbf16>, vector<128x128xbf16>, vector<64x128xf32> -> vector<64x128xf32>
    %13 = vector.shape_cast %12 : vector<64x128xf32> to vector<8x8x128xf32>
    %c0_6 = arith.constant 0 : index
    %c0_7 = arith.constant 0 : index
    %14 = vector.load %arg9[%c0_6, %c0_7] : memref<8x128xf32, #tpu.memory_space<vmem>>, vector<8x128xf32>
    %c0_8 = arith.constant 0 : index
    %c0_9 = arith.constant 0 : index
    %15 = vector.load %arg5[%c0_8, %c0_9] : memref<8x128xf32, #tpu.memory_space<vmem>>, vector<8x128xf32>
    %16 = vector.shape_cast %15 : vector<8x128xf32> to vector<1x8x128xf32>
    %17 = vector.broadcast %16 : vector<1x8x128xf32> to vector<8x8x128xf32>
    %18 = arith.addf %13, %17 : vector<8x8x128xf32>
    %cst_10 = arith.constant dense<0xFF800000> : vector<8x128xf32>
    %19 = vector.multi_reduction <maximumf>, %18, %cst_10 [1] : vector<8x8x128xf32> to vector<8x128xf32>
    %20 = arith.maximumf %14, %19 : vector<8x128xf32>
    %c0_11 = arith.constant 0 : index
    %c0_12 = arith.constant 0 : index
    %21 = vector.load %arg9[%c0_11, %c0_12] : memref<8x128xf32, #tpu.memory_space<vmem>>, vector<8x128xf32>
    tpu.vector_store %arg9[%c0_11, %c0_12], %20 {strides = array<i32>} : memref<8x128xf32, #tpu.memory_space<vmem>>, vector<8x128xf32>,
    %c0_i32_13 = arith.constant 0 : i32
    %22 = arith.cmpi eq, %arg1, %c0_i32_13 : i32
    %23 = arith.extui %22 : i1 to i32
    %c0_i32_14 = arith.constant 0 : i32
    %24 = arith.cmpi ne, %23, %c0_i32_14 : i32
    scf.if %24 {
      %c0_15 = arith.constant 0 : index
      %c0_16 = arith.constant 0 : index
      %25 = vector.load %arg9[%c0_15, %c0_16] : memref<8x128xf32, #tpu.memory_space<vmem>>, vector<8x128xf32>
      %c0_17 = arith.constant 0 : index
      %c0_18 = arith.constant 0 : index
      %26 = vector.load %arg4[%c0_17, %c0_18] : memref<1x128xf32, #tpu.memory_space<vmem>>, vector<1x128xf32>
      %27 = vector.broadcast %26 : vector<1x128xf32> to vector<8x128xf32>
      %28 = arith.addf %25, %27 : vector<8x128xf32>
      %cst_19 = arith.constant 0.000000e+00 : f32
      %29 = vector.broadcast %cst_19 : f32 to vector<8x128xf32>
      %30 = arith.maximumf %28, %29 : vector<8x128xf32>
      %c0_20 = arith.constant 0 : index
      %c0_21 = arith.constant 0 : index
      %31 = vector.load %arg6[%c0_20, %c0_21] : memref<128x128xf32, #tpu.memory_space<vmem>>, vector<128x128xf32>
      %cst_22 = arith.constant dense<0.000000e+00> : vector<8x128xf32>
      %32 = tpu.matmul %30, %31, %cst_22 {dimension_numbers = #tpu.dot_dimension_numbers<[1], [0], [0], [1], [0, 0, 1, 1], [], []>} : vector<8x128xf32>, vector<128x128xf32>, vector<8x128xf32> -> vector<8x128xf32>
      %c0_23 = arith.constant 0 : index
      %c0_24 = arith.constant 0 : index
      %33 = vector.load %arg7[%c0_23, %c0_24] : memref<1x128xf32, #tpu.memory_space<vmem>>, vector<1x128xf32>
      %34 = vector.broadcast %33 : vector<1x128xf32> to vector<8x128xf32>
      %35 = arith.addf %32, %34 : vector<8x128xf32>
      %36 = tpu.iota {dimensions = array<i32: 1>} : vector<8x128xi32>
      %c36_i32 = arith.constant 36 : i32
      %37 = vector.broadcast %c36_i32 : i32 to vector<8x128xi32>
      %38 = arith.cmpi slt, %36, %37 : vector<8x128xi32>
      %cst_25 = arith.constant -1.000000e+30 : f32
      %39 = vector.broadcast %cst_25 : f32 to vector<8x128xf32>
      %40 = arith.select %38, %35, %39 : vector<8x128xi1>, vector<8x128xf32>
      %cst_26 = arith.constant dense<0xFF800000> : vector<8xf32>
      %41 = vector.multi_reduction <maximumf>, %40, %cst_26 [1] : vector<8x128xf32> to vector<8xf32>
      %42 = vector.shape_cast %41 : vector<8xf32> to vector<8x1xf32>
      %43 = vector.broadcast %42 : vector<8x1xf32> to vector<8x128xf32>
      %44 = arith.subf %40, %43 : vector<8x128xf32>
      %45 = math.exp %44 : vector<8x128xf32>
      %cst_27 = arith.constant dense<0.000000e+00> : vector<8xf32>
      %46 = vector.multi_reduction <add>, %45, %cst_27 [1] : vector<8x128xf32> to vector<8xf32>
      %47 = vector.shape_cast %46 : vector<8xf32> to vector<8x1xf32>
      %48 = math.log %47 : vector<8x1xf32>
      %49 = vector.broadcast %48 : vector<8x1xf32> to vector<8x128xf32>
      %50 = arith.subf %44, %49 : vector<8x128xf32>
      %c0_28 = arith.constant 0 : index
      %c0_29 = arith.constant 0 : index
      %51 = vector.load %arg8[%c0_28, %c0_29] : memref<8x128xf32, #tpu.memory_space<vmem>>, vector<8x128xf32>
      tpu.vector_store %arg8[%c0_28, %c0_29], %50 {strides = array<i32>} : memref<8x128xf32, #tpu.memory_space<vmem>>, vector<8x128xf32>,
    } else {
    }
    return
  }
  func.func @transform_0(%arg0: i32, %arg1: i32) -> (i32, i32, i32, i32) {
    %c0_i32 = arith.constant 0 : i32
    %c0_i32_0 = arith.constant 0 : i32
    %c0_i32_1 = arith.constant 0 : i32
    return %arg0, %arg1, %c0_i32, %c0_i32_0 : i32, i32, i32, i32
  }
  func.func @transform_1(%arg0: i32, %arg1: i32) -> (i32, i32) {
    %c0_i32 = arith.constant 0 : i32
    %c0_i32_0 = arith.constant 0 : i32
    %c0_i32_1 = arith.constant 0 : i32
    return %c0_i32, %c0_i32_0 : i32, i32
  }
  func.func @transform_2(%arg0: i32, %arg1: i32) -> (i32, i32) {
    %c0_i32 = arith.constant 0 : i32
    %c0_i32_0 = arith.constant 0 : i32
    %c0_i32_1 = arith.constant 0 : i32
    return %c0_i32, %c0_i32_0 : i32, i32
  }
  func.func @transform_3(%arg0: i32, %arg1: i32) -> (i32, i32) {
    %c0_i32 = arith.constant 0 : i32
    %c0_i32_0 = arith.constant 0 : i32
    return %arg1, %c0_i32 : i32, i32
  }
  func.func @transform_4(%arg0: i32, %arg1: i32) -> (i32, i32) {
    %c0_i32 = arith.constant 0 : i32
    %c0_i32_0 = arith.constant 0 : i32
    %c0_i32_1 = arith.constant 0 : i32
    return %c0_i32, %c0_i32_0 : i32, i32
  }
  func.func @transform_5(%arg0: i32, %arg1: i32) -> (i32, i32) {
    %c0_i32 = arith.constant 0 : i32
    %c0_i32_0 = arith.constant 0 : i32
    %c0_i32_1 = arith.constant 0 : i32
    return %c0_i32, %c0_i32_0 : i32, i32
  }
  func.func @transform_6(%arg0: i32, %arg1: i32) -> (i32, i32) {
    %c0_i32 = arith.constant 0 : i32
    %c0_i32_0 = arith.constant 0 : i32
    return %arg0, %c0_i32 : i32, i32
  }
}

</mosaic_0001>

<llo_original>
// kernel: tpu_custom_call.1
$region0: #{tpu_custom_call.1}
  #allocation0 [shape = 'u32[]', space=smem, size = 0x4, offset = 0x4, fixed_abs, tag = 'smem constant byte address 0x4 - core index']
  #allocation1 [shape = 'u32[72,128]{1,0:T(1,128)}', space=vmem, size = 0x9000, scoped, tag = 'internal scratch']
  #allocation2 [shape = 'f32[8,128]{1,0:T(8,128)}', space=vmem, size = 0x1000, scoped, tag = 'scratch operand']
  %s0 = inlined_call_operand.vmem [shape: bf16[16,1,11,32], index: 0, kind: input, shape index: {}]
  %s1 = inlined_call_operand.vmem [shape: bf16[128,128], index: 1, kind: input, shape index: {}]
  %s2 = inlined_call_operand.vmem [shape: f32[1,128], index: 2, kind: input, shape index: {}]
  %s3 = inlined_call_operand.vmem [shape: f32[8,128], index: 3, kind: input, shape index: {}]
  %s4 = inlined_call_operand.vmem [shape: f32[128,128], index: 4, kind: input, shape index: {}]
  %s5 = inlined_call_operand.vmem [shape: f32[1,128], index: 5, kind: input, shape index: {}]
  %s6 = inlined_call_operand.hbm [shape: f32[16,128], index: 6, kind: output, shape index: {}]
  %s7 = sld [smem:[#allocation0]]
  $region65: #{tpu_custom_call.1} parent=0
    _
  %s9 = ssub.s32 1, %s7
  %s10 = scalar_select 0, %s9, %s7
  $region1: #{tpu_custom_call.1} parent=0
    #allocation3 [shape = 'u8[8192]{0}', space=vmem, size = 0x2000, scoped, tag = 'output window, operand 0']
    #allocation4 [shape = 's32[2]{0}', space=sflag, size = 0x8, scoped, tag = 'scoped memory for tpu_custom_call.1']
    %11 = vsyncpa [#allocation4], 0
    %s12 = scalar_lea.sflag [#allocation4], 1
    %13 = vsyncpa %s12, 0
    loop: start=0, step=1, limit=4
    $region2: #{tpu_custom_call.1} parent=1 // loop_pre_header
      _
    $region3: #{tpu_custom_call.1} parent=1 // loop_header
      %s15 = sphi 0, %s19
      %p16 = scmp.ge.s32.totalorder %s15, 4
      %s22 = sphi 0, %s34
      %s23 = sphi 0, %s30
      %s24 = sphi 0, %s22
      %s25 = sphi 0, %s23
      %s26 = sphi 0, %s24
      %s27 = sphi 0, %s25
      %s39 = sphi 0, %s41
      %s42 = sphi 0, %s39
      %s43 = sphi 0, %s42
      %s59 = sphi 0, %s43
      %s63 = sphi 0, %s63
      %s65 = sphi 0, %s63
      %s66 = sphi 0, %s65
      %s80 = sphi 0, %s66
      %s84 = sphi 0, %s84
      %s86 = sphi 0, %s84
      %s87 = sphi 0, %s86
      %s101 = sphi 0, %s87
      %s107 = sphi 0, %s109
      %s110 = sphi 0, %s107
      %s111 = sphi 0, %s110
      %s127 = sphi 0, %s111
      %s131 = sphi 0, %s131
      %s133 = sphi 0, %s131
      %s134 = sphi 0, %s133
      %s148 = sphi 0, %s134
      %s152 = sphi 0, %s152
      %s154 = sphi 0, %s152
      %s155 = sphi 0, %s154
      %s169 = sphi 0, %s155
      %s175 = sphi 0, %s177
      %s178 = sphi 0, %s175
      %s179 = sphi 0, %s178
      %s195 = sphi 0, %s179
    $region4: #{tpu_custom_call.1} parent=1 // loop_header_branch
      %18 = sbr.rel (%p16) target = $region8
    $region5: #{tpu_custom_call.1} parent=1 // loop_body
      %s20 = ssub.s32 %s15, 1
      %s21 = ssub.s32 %s15, 2
      %s28 = sadd.s32 1, %s23
      %p29 = scmp.ge.s32.totalorder %s28, 1
      %s30 = scalar_select %p29, 0, %s28
      %s31 = sadd.s32 1, %s22
      %s32 = scalar_select %p29, %s31, %s22
      %p33 = scmp.ge.s32.totalorder %s32, 2
      %s34 = scalar_select %p33, 0, %s32
      %s35 = ssub.s32 %s22, %s34
      %s36 = ssub.s32 %s23, %s30
      %s37 = sor.u32 %s35, %s36
      %p38 = scmp.eq.s32.totalorder %s37, 0
      %s40 = sadd.s32 %s39, 1
      %s41 = scalar_select %p38, %s39, %s40
      %p44 = pneg %p38
      %p45 = scmp.eq.s32.totalorder %s15, 1
      %p46 = por %p44, %p45
      %p47 = scmp.ne.s32.totalorder %s39, %s42
      %p48 = scmp.eq.s32.totalorder %s15, 0
      %p49 = por %p47, %p48
      %p50 = scmp.ne.s32.totalorder %s39, %s42
      %p51 = scmp.eq.s32.totalorder %s20, 1
      %p52 = por %p50, %p51
      %p53 = scmp.ne.s32.totalorder %s42, %s43
      %p54 = scmp.eq.s32.totalorder %s20, 0
      %p55 = por %p53, %p54
      %p56 = scmp.ne.s32.totalorder %s42, %s43
      %p57 = scmp.eq.s32.totalorder %s21, 1
      %p58 = por %p56, %p57
      %p60 = scmp.ne.s32.totalorder %s43, %s59
      %p61 = scmp.eq.s32.totalorder %s21, 0
      %p62 = por %p60, %p61
      %s64 = sadd.s32 %s63, 1
      %p67 = scmp.eq.s32.totalorder %s15, 1
      %p68 = scmp.ne.s32.totalorder %s63, %s65
      %p69 = scmp.eq.s32.totalorder %s15, 0
      %p70 = por %p68, %p69
      %p71 = scmp.ne.s32.totalorder %s63, %s65
      %p72 = scmp.eq.s32.totalorder %s20, 1
      %p73 = por %p71, %p72
      %p74 = scmp.ne.s32.totalorder %s65, %s66
      %p75 = scmp.eq.s32.totalorder %s20, 0
      %p76 = por %p74, %p75
      %p77 = scmp.ne.s32.totalorder %s65, %s66
      %p78 = scmp.eq.s32.totalorder %s21, 1
      %p79 = por %p77, %p78
      %p81 = scmp.ne.s32.totalorder %s66, %s80
      %p82 = scmp.eq.s32.totalorder %s21, 0
      %p83 = por %p81, %p82
      %s85 = sadd.s32 %s84, 1
      %p88 = scmp.eq.s32.totalorder %s15, 1
      %p89 = scmp.ne.s32.totalorder %s84, %s86
      %p90 = scmp.eq.s32.totalorder %s15, 0
      %p91 = por %p89, %p90
      %p92 = scmp.ne.s32.totalorder %s84, %s86
      %p93 = scmp.eq.s32.totalorder %s20, 1
      %p94 = por %p92, %p93
      %p95 = scmp.ne.s32.totalorder %s86, %s87
      %p96 = scmp.eq.s32.totalorder %s20, 0
      %p97 = por %p95, %p96
      %p98 = scmp.ne.s32.totalorder %s86, %s87
      %p99 = scmp.eq.s32.totalorder %s21, 1
      %p100 = por %p98, %p99
      %p102 = scmp.ne.s32.totalorder %s87, %s101
      %p103 = scmp.eq.s32.totalorder %s21, 0
      %p104 = por %p102, %p103
      %s105 = ssub.s32 %s23, %s30
      %p106 = scmp.eq.s32.totalorder %s105, 0
      %s108 = sadd.s32 %s107, 1
      %s109 = scalar_select %p106, %s107, %s108
      %p112 = pneg %p106
      %p113 = scmp.eq.s32.totalorder %s15, 1
      %p114 = por %p112, %p113
      %p115 = scmp.ne.s32.totalorder %s107, %s110
      %p116 = scmp.eq.s32.totalorder %s15, 0
      %p117 = por %p115, %p116
      %p118 = scmp.ne.s32.totalorder %s107, %s110
      %p119 = scmp.eq.s32.totalorder %s20, 1
      %p120 = por %p118, %p119
      %p121 = scmp.ne.s32.totalorder %s110, %s111
      %p122 = scmp.eq.s32.totalorder %s20, 0
      %p123 = por %p121, %p122
      %p124 = scmp.ne.s32.totalorder %s110, %s111
      %p125 = scmp.eq.s32.totalorder %s21, 1
      %p126 = por %p124, %p125
      %p128 = scmp.ne.s32.totalorder %s111, %s127
      %p129 = scmp.eq.s32.totalorder %s21, 0
      %p130 = por %p128, %p129
      %s132 = sadd.s32 %s131, 1
      %p135 = scmp.eq.s32.totalorder %s15, 1
      %p136 = scmp.ne.s32.totalorder %s131, %s133
      %p137 = scmp.eq.s32.totalorder %s15, 0
      %p138 = por %p136, %p137
      %p139 = scmp.ne.s32.totalorder %s131, %s133
      %p140 = scmp.eq.s32.totalorder %s20, 1
      %p141 = por %p139, %p140
      %p142 = scmp.ne.s32.totalorder %s133, %s134
      %p143 = scmp.eq.s32.totalorder %s20, 0
      %p144 = por %p142, %p143
      %p145 = scmp.ne.s32.totalorder %s133, %s134
      %p146 = scmp.eq.s32.totalorder %s21, 1
      %p147 = por %p145, %p146
      %p149 = scmp.ne.s32.totalorder %s134, %s148
      %p150 = scmp.eq.s32.totalorder %s21, 0
      %p151 = por %p149, %p150
      %s153 = sadd.s32 %s152, 1
      %p156 = scmp.eq.s32.totalorder %s15, 1
      %p157 = scmp.ne.s32.totalorder %s152, %s154
      %p158 = scmp.eq.s32.totalorder %s15, 0
      %p159 = por %p157, %p158
      %p160 = scmp.ne.s32.totalorder %s152, %s154
      %p161 = scmp.eq.s32.totalorder %s20, 1
      %p162 = por %p160, %p161
      %p163 = scmp.ne.s32.totalorder %s154, %s155
      %p164 = scmp.eq.s32.totalorder %s20, 0
      %p165 = por %p163, %p164
      %p166 = scmp.ne.s32.totalorder %s154, %s155
      %p167 = scmp.eq.s32.totalorder %s21, 1
      %p168 = por %p166, %p167
      %p170 = scmp.ne.s32.totalorder %s155, %s169
      %p171 = scmp.eq.s32.totalorder %s21, 0
      %p172 = por %p170, %p171
      %s173 = ssub.s32 %s22, %s34
      %p174 = scmp.eq.s32.totalorder %s173, 0
      %s176 = sadd.s32 %s175, 1
      %s177 = scalar_select %p174, %s175, %s176
      %p180 = pneg %p174
      %p181 = scmp.eq.s32.totalorder %s15, 1
      %p182 = por %p180, %p181
      %p183 = scmp.ne.s32.totalorder %s175, %s178
      %p184 = scmp.eq.s32.totalorder %s15, 0
      %p185 = por %p183, %p184
      %p186 = scmp.ne.s32.totalorder %s175, %s178
      %p187 = scmp.eq.s32.totalorder %s20, 1
      %p188 = por %p186, %p187
      %p189 = scmp.ne.s32.totalorder %s178, %s179
      %p190 = scmp.eq.s32.totalorder %s20, 0
      %p191 = por %p189, %p190
      %p192 = scmp.ne.s32.totalorder %s178, %s179
      %p193 = scmp.eq.s32.totalorder %s21, 1
      %p194 = por %p192, %p193
      %p196 = scmp.ne.s32.totalorder %s179, %s195
      %p197 = scmp.eq.s32.totalorder %s21, 0
      %p198 = por %p196, %p197
      %p199 = scmp.le.s32.totalorder 1, %s15
      %p200 = scmp.lt.s32.totalorder %s15, 3
      %p201 = pnand %p199, %p200
      %p202 = pneg %p201
      // Predicated region
      $region9: #{tpu_custom_call.1} parent=5 // pred_check
        _
      $region10: #{tpu_custom_call.1} parent=5 // pred_check_branch
        %204 = sbr.rel (%p201) target = $region12
      $region11: #{tpu_custom_call.1} parent=5 // pred_region
        %s205 = ssub.s32 %s15, 1
        // Predicated region
        $region13: #{tpu_custom_call.1} parent=11 // pred_check
          %p206 = pneg %p76
        $region14: #{tpu_custom_call.1} parent=11 // pred_check_branch
          %208 = sbr.rel (%p206) target = $region16
        $region15: #{tpu_custom_call.1} parent=11 // pred_region
          _
        $region16: #{tpu_custom_call.1} parent=11 // pred_fallthru
          _
        // Predicated region
        $region17: #{tpu_custom_call.1} parent=11 // pred_check
          %p209 = pneg %p97
        $region18: #{tpu_custom_call.1} parent=11 // pred_check_branch
          %211 = sbr.rel (%p209) target = $region20
        $region19: #{tpu_custom_call.1} parent=11 // pred_region
          _
        $region20: #{tpu_custom_call.1} parent=11 // pred_fallthru
          _
        // Predicated region
        $region21: #{tpu_custom_call.1} parent=11 // pred_check
          %p212 = pneg %p123
        $region22: #{tpu_custom_call.1} parent=11 // pred_check_branch
          %214 = sbr.rel (%p212) target = $region24
        $region23: #{tpu_custom_call.1} parent=11 // pred_region
          %p215 = scmp.lt.s32.totalorder %s25, 0
          %s216 = scalar_select %p215, %s25, 0
          %s217 = smul.addr %s216, 8
          %s218 = scalar_lea.vmem %s3, %s217
        $region24: #{tpu_custom_call.1} parent=11 // pred_fallthru
          _
        // Predicated region
        $region25: #{tpu_custom_call.1} parent=11 // pred_check
          %p219 = pneg %p144
        $region26: #{tpu_custom_call.1} parent=11 // pred_check_branch
          %221 = sbr.rel (%p219) target = $region28
        $region27: #{tpu_custom_call.1} parent=11 // pred_region
          _
        $region28: #{tpu_custom_call.1} parent=11 // pred_fallthru
          _
        // Predicated region
        $region29: #{tpu_custom_call.1} parent=11 // pred_check
          %p222 = pneg %p165
        $region30: #{tpu_custom_call.1} parent=11 // pred_check_branch
          %224 = sbr.rel (%p222) target = $region32
        $region31: #{tpu_custom_call.1} parent=11 // pred_region
          _
        $region32: #{tpu_custom_call.1} parent=11 // pred_fallthru
          _
      $region12: #{tpu_custom_call.1} parent=5 // pred_fallthru
        _
      %p225 = scmp.lt.s32.totalorder %s15, 2
      // Predicated region
      $region33: #{tpu_custom_call.1} parent=5 // pred_check
        %p226 = pneg %p225
      $region34: #{tpu_custom_call.1} parent=5 // pred_check_branch
        %228 = sbr.rel (%p226) target = $region36
      $region35: #{tpu_custom_call.1} parent=5 // pred_region
        // Predicated region
        $region37: #{tpu_custom_call.1} parent=35 // pred_check
          %p229 = pneg %p49
        $region38: #{tpu_custom_call.1} parent=35 // pred_check_branch
          %231 = sbr.rel (%p229) target = $region40
        $region39: #{tpu_custom_call.1} parent=35 // pred_region
          %s232 = smul.u32 8, %s22
          %p233 = scmp.lt.s32.totalorder %s232, 15
          %s234 = scalar_select %p233, %s232, 15
          %p235 = scmp.lt.s32.totalorder %s23, 0
          %s236 = scalar_select %p235, %s23, 0
          %s237 = smul.addr %s236, 2
          %s238 = smul.addr %s234, 2
          %s239 = sadd.s32 %s237, %s238
          %s240 = smul.addr %s239, 4
          %s241 = scalar_lea.vmem %s0, %s240
          %s242 = smul.u32 8, %s22
        $region40: #{tpu_custom_call.1} parent=35 // pred_fallthru
          _
      $region36: #{tpu_custom_call.1} parent=5 // pred_fallthru
        _
      %p243 = scmp.le.s32.totalorder 1, %s15
      %p244 = scmp.lt.s32.totalorder %s15, 3
      %p245 = pnand %p243, %p244
      %p246 = pneg %p245
      // Predicated region
      $region41: #{tpu_custom_call.1} parent=5 // pred_check
        _
      $region42: #{tpu_custom_call.1} parent=5 // pred_check_branch
        %248 = sbr.rel (%p245) target = $region44
      $region43: #{tpu_custom_call.1} parent=5 // pred_region
        %s249 = ssub.s32 %s15, 1
        %s250 = smul.u32 8, %s24
        %p251 = scmp.lt.s32.totalorder %s250, 15
        %s252 = scalar_select %p251, %s250, 15
        %p253 = scmp.lt.s32.totalorder %s25, 0
        %s254 = scalar_select %p253, %s25, 0
        %s255 = smul.addr %s254, 2
        %s256 = smul.addr %s252, 2
        %s257 = sadd.s32 %s255, %s256
        %s258 = smul.addr %s257, 4
        %s259 = scalar_lea.vmem %s0, %s258
        %p260 = pneg %p55
        %p261 = pneg %p52
        %p262 = pneg %p76
        %p263 = pneg %p73
        %p264 = pneg %p97
        %p265 = pneg %p94
        %p266 = scmp.lt.s32.totalorder %s25, 0
        %s267 = scalar_select %p266, %s25, 0
        %s268 = smul.addr %s267, 8
        %s269 = scalar_lea.vmem %s3, %s268
        %p270 = pneg %p123
        %p271 = pneg %p120
        %p272 = pneg %p144
        %p273 = pneg %p141
        %p274 = pneg %p165
        %p275 = pneg %p162
        %p276 = pneg %p191
        %p277 = pneg %p188
        %s278 = sand.u32 %s178, 1
        %s279 = scalar_lea.sflag [#allocation4], %s278
        %s280 = sand.u32 %s178, 1
        %s281 = smul.addr %s280, 8
        %s282 = scalar_lea.vmem [#allocation3], %s281
        %s283 = smul.u32 8, %s24
        %p284 = scmp.lt.s32.totalorder %s283, 15
        %s285 = scalar_select %p284, %s283, 15
        %p286 = scmp.lt.s32.totalorder %s25, 0
        %s287 = scalar_select %p286, %s25, 0
        %s288 = smul.addr %s287, 2
        %s289 = smul.addr %s285, 2
        %s290 = sadd.s32 %s288, %s289
        %s291 = smul.addr %s290, 4
        %s292 = scalar_lea.vmem %s0, %s291
        %s293 = smul.u32 8, %s24
        %p294 = scmp.lt.s32.totalorder %s25, 0
        %s295 = scalar_select %p294, %s25, 0
        %s296 = smul.addr %s295, 8
        %s297 = scalar_lea.vmem %s3, %s296
        %p298 = scmp.eq.s32.totalorder %s25, 0
        // Predicated region
        $region45: #{tpu_custom_call.1} parent=43 // pred_check
          %p299 = pneg %p298
        $region46: #{tpu_custom_call.1} parent=43 // pred_check_branch
          %301 = sbr.rel (%p299) target = $region48
        $region47: #{tpu_custom_call.1} parent=43 // pred_region
          %302 = vst [vmem:[#allocation2] sm:$0xff] -1e+30
        $region48: #{tpu_custom_call.1} parent=43 // pred_fallthru
          _
        %v303 = vld [vmem:[%s292] sm:$0xf]
        %v304 = vld [vmem:[%s292 + $0x4] sm:$0x3]
        %v305 = vld [vmem:[%s292 + $0x8] sm:$0xf]
        %v306 = vld [vmem:[%s292 + $0xc] sm:$0x3]
        %v307 = vld [vmem:[%s292 + $0x10] sm:$0xf]
        %v308 = vld [vmem:[%s292 + $0x14] sm:$0x3]
        %v309 = vld [vmem:[%s292 + $0x18] sm:$0xf]
        %v310 = vld [vmem:[%s292 + $0x1c] sm:$0x3]
        %v311 = vld [vmem:[%s292 + $0x20] sm:$0xf]
        %v312 = vld [vmem:[%s292 + $0x24] sm:$0x3]
        %v313 = vld [vmem:[%s292 + $0x28] sm:$0xf]
        %v314 = vld [vmem:[%s292 + $0x2c] sm:$0x3]
        %v315 = vld [vmem:[%s292 + $0x30] sm:$0xf]
        %v316 = vld [vmem:[%s292 + $0x34] sm:$0x3]
        %v317 = vld [vmem:[%s292 + $0x38] sm:$0xf]
        %v318 = vld [vmem:[%s292 + $0x3c] sm:$0x3]
        %v335 = vunpack.c.l.b16 %v303
        %v336 = vunpack.c.l.b16 %v304
        %v337 = vunpack.c.l.b16 %v305
        %v338 = vunpack.c.l.b16 %v306
        %v339 = vunpack.c.l.b16 %v307
        %v340 = vunpack.c.l.b16 %v308
        %v341 = vunpack.c.l.b16 %v309
        %v342 = vunpack.c.l.b16 %v310
        %v343 = vunpack.c.l.b16 %v311
        %v344 = vunpack.c.l.b16 %v312
        %v345 = vunpack.c.l.b16 %v313
        %v346 = vunpack.c.l.b16 %v314
        %v347 = vunpack.c.l.b16 %v315
        %v348 = vunpack.c.l.b16 %v316
        %v349 = vunpack.c.l.b16 %v317
        %v350 = vunpack.c.l.b16 %v318
        %v351 = vpack.c.b16 %v336, %v335
        %v352 = vpack.c.b16 %v338, %v337
        %v353 = vpack.c.b16 %v340, %v339
        %v354 = vpack.c.b16 %v342, %v341
        %v355 = vpack.c.b16 %v344, %v343
        %v356 = vpack.c.b16 %v346, %v345
        %v357 = vpack.c.b16 %v348, %v347
        %v358 = vpack.c.b16 %v350, %v349
        %v360 = vshrl.u32 %v351, 16
        %v362 = vshll.u32 %v351, 16
        %v364 = vrot.slane %v362, 1
        %v365 = vor.u32 %v360, %v364
        %v367 = vshrl.u32 %v352, 16
        %v369 = vshll.u32 %v352, 16
        %v371 = vrot.slane %v369, 1
        %v372 = vor.u32 %v367, %v371
        %v374 = vshrl.u32 %v353, 16
        %v376 = vshll.u32 %v353, 16
        %v378 = vrot.slane %v376, 1
        %v379 = vor.u32 %v374, %v378
        %v381 = vshrl.u32 %v354, 16
        %v383 = vshll.u32 %v354, 16
        %v385 = vrot.slane %v383, 1
        %v386 = vor.u32 %v381, %v385
        %v388 = vshrl.u32 %v355, 16
        %v390 = vshll.u32 %v355, 16
        %v392 = vrot.slane %v390, 1
        %v393 = vor.u32 %v388, %v392
        %v395 = vshrl.u32 %v356, 16
        %v397 = vshll.u32 %v356, 16
        %v399 = vrot.slane %v397, 1
        %v400 = vor.u32 %v395, %v399
        %v402 = vshrl.u32 %v357, 16
        %v404 = vshll.u32 %v357, 16
        %v406 = vrot.slane %v404, 1
        %v407 = vor.u32 %v402, %v406
        %v409 = vshrl.u32 %v358, 16
        %v411 = vshll.u32 %v358, 16
        %v413 = vrot.slane %v411, 1
        %v414 = vor.u32 %v409, %v413
        %415 = vrot.lane.b32.xlu0 %v365, 32
        %v416 = vpop.permute.xlu0 %415
        %417 = vrot.lane.b32.xlu0 %v372, 32
        %v418 = vpop.permute.xlu0 %417
        %419 = vrot.lane.b32.xlu0 %v379, 32
        %v420 = vpop.permute.xlu0 %419
        %421 = vrot.lane.b32.xlu0 %v386, 32
        %v422 = vpop.permute.xlu0 %421
        %423 = vrot.lane.b32.xlu0 %v393, 32
        %v424 = vpop.permute.xlu0 %423
        %425 = vrot.lane.b32.xlu0 %v400, 32
        %v426 = vpop.permute.xlu0 %425
        %427 = vrot.lane.b32.xlu0 %v407, 32
        %v428 = vpop.permute.xlu0 %427
        %429 = vrot.lane.b32.xlu0 %v414, 32
        %v430 = vpop.permute.xlu0 %429
        %v431 = vrot.slane %v351, 1
        %v432 = vrot.slane %v352, 1
        %v433 = vrot.slane %v353, 1
        %v434 = vrot.slane %v354, 1
        %v435 = vrot.slane %v355, 1
        %v436 = vrot.slane %v356, 1
        %v437 = vrot.slane %v357, 1
        %v438 = vrot.slane %v358, 1
        %439 = vrot.lane.b32.xlu0 %v431, 64
        %v440 = vpop.permute.xlu0 %439
        %441 = vrot.lane.b32.xlu0 %v432, 64
        %v442 = vpop.permute.xlu0 %441
        %443 = vrot.lane.b32.xlu0 %v433, 64
        %v444 = vpop.permute.xlu0 %443
        %445 = vrot.lane.b32.xlu0 %v434, 64
        %v446 = vpop.permute.xlu0 %445
        %447 = vrot.lane.b32.xlu0 %v435, 64
        %v448 = vpop.permute.xlu0 %447
        %449 = vrot.lane.b32.xlu0 %v436, 64
        %v450 = vpop.permute.xlu0 %449
        %451 = vrot.lane.b32.xlu0 %v437, 64
        %v452 = vpop.permute.xlu0 %451
        %453 = vrot.lane.b32.xlu0 %v438, 64
        %v454 = vpop.permute.xlu0 %453
        %v455 = vrot.slane %v360, 1
        %v456 = vrot.slane %v362, 2
        %v457 = vor.u32 %v455, %v456
        %v458 = vrot.slane %v367, 1
        %v459 = vrot.slane %v369, 2
        %v460 = vor.u32 %v458, %v459
        %v461 = vrot.slane %v374, 1
        %v462 = vrot.slane %v376, 2
        %v463 = vor.u32 %v461, %v462
        %v464 = vrot.slane %v381, 1
        %v465 = vrot.slane %v383, 2
        %v466 = vor.u32 %v464, %v465
        %v467 = vrot.slane %v388, 1
        %v468 = vrot.slane %v390, 2
        %v469 = vor.u32 %v467, %v468
        %v470 = vrot.slane %v395, 1
        %v471 = vrot.slane %v397, 2
        %v472 = vor.u32 %v470, %v471
        %v473 = vrot.slane %v402, 1
        %v474 = vrot.slane %v404, 2
        %v475 = vor.u32 %v473, %v474
        %v476 = vrot.slane %v409, 1
        %v477 = vrot.slane %v411, 2
        %v478 = vor.u32 %v476, %v477
        %479 = vrot.lane.b32.xlu0 %v457, 96
        %v480 = vpop.permute.xlu0 %479
        %481 = vrot.lane.b32.xlu0 %v460, 96
        %v482 = vpop.permute.xlu0 %481
        %483 = vrot.lane.b32.xlu0 %v463, 96
        %v484 = vpop.permute.xlu0 %483
        %485 = vrot.lane.b32.xlu0 %v466, 96
        %v486 = vpop.permute.xlu0 %485
        %487 = vrot.lane.b32.xlu0 %v469, 96
        %v488 = vpop.permute.xlu0 %487
        %489 = vrot.lane.b32.xlu0 %v472, 96
        %v490 = vpop.permute.xlu0 %489
        %491 = vrot.lane.b32.xlu0 %v475, 96
        %v492 = vpop.permute.xlu0 %491
        %493 = vrot.lane.b32.xlu0 %v478, 96
        %v494 = vpop.permute.xlu0 %493
        %vm495 = vcmask 261120
        %v498 = vsel %vm495, %v303, %v416
        %v501 = vsel %vm495, %v305, %v418
        %v504 = vsel %vm495, %v307, %v420
        %v507 = vsel %vm495, %v309, %v422
        %v510 = vsel %vm495, %v311, %v424
        %v513 = vsel %vm495, %v313, %v426
        %v516 = vsel %vm495, %v315, %v428
        %v519 = vsel %vm495, %v317, %v430
        %vm520 = vcmask 523264
        %v522 = vsel %vm520, %v498, %v440
        %v524 = vsel %vm520, %v501, %v442
        %v526 = vsel %vm520, %v504, %v444
        %v528 = vsel %vm520, %v507, %v446
        %v530 = vsel %vm520, %v510, %v448
        %v532 = vsel %vm520, %v513, %v450
        %v534 = vsel %vm520, %v516, %v452
        %v536 = vsel %vm520, %v519, %v454
        %vm537 = vcmask 785408
        %v539 = vsel %vm537, %v522, %v480
        %v541 = vsel %vm537, %v524, %v482
        %v543 = vsel %vm537, %v526, %v484
        %v545 = vsel %vm537, %v528, %v486
        %v547 = vsel %vm537, %v530, %v488
        %v549 = vsel %vm537, %v532, %v490
        %v551 = vsel %vm537, %v534, %v492
        %v553 = vsel %vm537, %v536, %v494
        %v554 = vld [vmem:[%s1] sm:$0xf]
        %v555 = vld [vmem:[%s1 + $0x4] sm:$0xf]
        %v556 = vld [vmem:[%s1 + $0x8] sm:$0xf]
        %v557 = vld [vmem:[%s1 + $0xc] sm:$0xf]
        %v558 = vld [vmem:[%s1 + $0x10] sm:$0xf]
        %v559 = vld [vmem:[%s1 + $0x14] sm:$0xf]
        %v560 = vld [vmem:[%s1 + $0x18] sm:$0xf]
        %v561 = vld [vmem:[%s1 + $0x1c] sm:$0xf]
        %v562 = vld [vmem:[%s1 + $0x20] sm:$0xf]
        %v563 = vld [vmem:[%s1 + $0x24] sm:$0xf]
        %v564 = vld [vmem:[%s1 + $0x28] sm:$0xf]
        %v565 = vld [vmem:[%s1 + $0x2c] sm:$0xf]
        %v566 = vld [vmem:[%s1 + $0x30] sm:$0xf]
        %v567 = vld [vmem:[%s1 + $0x34] sm:$0xf]
        %v568 = vld [vmem:[%s1 + $0x38] sm:$0xf]
        %v569 = vld [vmem:[%s1 + $0x3c] sm:$0xf]
        %v578 = vunpack.c.l.b16 %v539
        %v579 = vunpack.c.l.b16 %v541
        %v580 = vunpack.c.l.b16 %v543
        %v581 = vunpack.c.l.b16 %v545
        %v582 = vunpack.c.l.b16 %v547
        %v583 = vunpack.c.l.b16 %v549
        %v584 = vunpack.c.l.b16 %v551
        %v585 = vunpack.c.l.b16 %v553
        %v586 = vpack.c.b16 %v579, %v578
        %v587 = vpack.c.b16 %v581, %v580
        %v588 = vpack.c.b16 %v583, %v582
        %v589 = vpack.c.b16 %v585, %v584
        %v610 = vunpack.c.l.b16 %v554
        %v611 = vunpack.c.l.b16 %v555
        %v612 = vunpack.c.l.b16 %v556
        %v613 = vunpack.c.l.b16 %v557
        %v614 = vunpack.c.l.b16 %v558
        %v615 = vunpack.c.l.b16 %v559
        %v616 = vunpack.c.l.b16 %v560
        %v617 = vunpack.c.l.b16 %v561
        %v618 = vunpack.c.l.b16 %v562
        %v619 = vunpack.c.l.b16 %v563
        %v620 = vunpack.c.l.b16 %v564
        %v621 = vunpack.c.l.b16 %v565
        %v622 = vunpack.c.l.b16 %v566
        %v623 = vunpack.c.l.b16 %v567
        %v624 = vunpack.c.l.b16 %v568
        %v625 = vunpack.c.l.b16 %v569
        %v626 = vpack.c.b16 %v611, %v610
        %v627 = vpack.c.b16 %v613, %v612
        %v628 = vpack.c.b16 %v615, %v614
        %v629 = vpack.c.b16 %v617, %v616
        %v630 = vpack.c.b16 %v619, %v618
        %v631 = vpack.c.b16 %v621, %v620
        %v632 = vpack.c.b16 %v623, %v622
        %v633 = vpack.c.b16 %v625, %v624
        %642 = vmatpush.bf16.msra.mxu0 %v633
        %643 = vmatpush.bf16.msra.mxu0 %v632
        %644 = vmatpush.bf16.msra.mxu0 %v631
        %645 = vmatpush.bf16.msra.mxu0 %v630
        %646 = vmatpush.bf16.msra.mxu0 %v629
        %647 = vmatpush.bf16.msra.mxu0 %v628
        %648 = vmatpush.bf16.msra.mxu0 %v627
        %649 = vmatpush.bf16.msra.mxu0 %v626
        %650 = vmatmul.bf16.gmra.mxu0 %v586
        %v651 = vpop.f32.mrf.mxu0
        %v652 = vadd.f32 0.0, %v651
        %v653 = vpop.f32.mrf.mxu0
        %v654 = vadd.f32 0.0, %v653
        %655 = vmatmul.bf16.gmra.mxu0 %v587
        %v656 = vpop.f32.mrf.mxu0
        %v657 = vadd.f32 0.0, %v656
        %v658 = vpop.f32.mrf.mxu0
        %v659 = vadd.f32 0.0, %v658
        %660 = vmatmul.bf16.gmra.mxu0 %v588
        %v661 = vpop.f32.mrf.mxu0
        %v662 = vadd.f32 0.0, %v661
        %v663 = vpop.f32.mrf.mxu0
        %v664 = vadd.f32 0.0, %v663
        %665 = vmatmul.bf16.gmra.mxu0 %v589
        %v666 = vpop.f32.mrf.mxu0
        %v667 = vadd.f32 0.0, %v666
        %v668 = vpop.f32.mrf.mxu0
        %v669 = vadd.f32 0.0, %v668
        %670 = vdwg.mxu0
        %v671 = vld [vmem:[#allocation2] sm:$0xff]
        %v672 = vld [vmem:[%s297] sm:$0xff]
        %v673 = vadd.f32 %v652, %v672
        %v674 = vadd.f32 %v654, %v672
        %v675 = vadd.f32 %v657, %v672
        %v676 = vadd.f32 %v659, %v672
        %v677 = vadd.f32 %v662, %v672
        %v678 = vadd.f32 %v664, %v672
        %v679 = vadd.f32 %v667, %v672
        %v680 = vadd.f32 %v669, %v672
        %v681 = vrot.slane %v673, 4
        %v682 = vmax.f32 %v673, %v681
        %v683 = vrot.slane %v682, 2
        %v684 = vmax.f32 %v682, %v683
        %v685 = vrot.slane %v684, 1
        %v686 = vmax.f32 %v684, %v685
        %v687 = vrot.slane %v674, 4
        %v688 = vmax.f32 %v674, %v687
        %v689 = vrot.slane %v688, 2
        %v690 = vmax.f32 %v688, %v689
        %v691 = vrot.slane %v690, 1
        %v692 = vmax.f32 %v690, %v691
        %v693 = vrot.slane %v675, 4
        %v694 = vmax.f32 %v675, %v693
        %v695 = vrot.slane %v694, 2
        %v696 = vmax.f32 %v694, %v695
        %v697 = vrot.slane %v696, 1
        %v698 = vmax.f32 %v696, %v697
        %v699 = vrot.slane %v676, 4
        %v700 = vmax.f32 %v676, %v699
        %v701 = vrot.slane %v700, 2
        %v702 = vmax.f32 %v700, %v701
        %v703 = vrot.slane %v702, 1
        %v704 = vmax.f32 %v702, %v703
        %v705 = vrot.slane %v677, 4
        %v706 = vmax.f32 %v677, %v705
        %v707 = vrot.slane %v706, 2
        %v708 = vmax.f32 %v706, %v707
        %v709 = vrot.slane %v708, 1
        %v710 = vmax.f32 %v708, %v709
        %v711 = vrot.slane %v678, 4
        %v712 = vmax.f32 %v678, %v711
        %v713 = vrot.slane %v712, 2
        %v714 = vmax.f32 %v712, %v713
        %v715 = vrot.slane %v714, 1
        %v716 = vmax.f32 %v714, %v715
        %v717 = vrot.slane %v679, 4
        %v718 = vmax.f32 %v679, %v717
        %v719 = vrot.slane %v718, 2
        %v720 = vmax.f32 %v718, %v719
        %v721 = vrot.slane %v720, 1
        %v722 = vmax.f32 %v720, %v721
        %v723 = vrot.slane %v680, 4
        %v724 = vmax.f32 %v680, %v723
        %v725 = vrot.slane %v724, 2
        %v726 = vmax.f32 %v724, %v725
        %v727 = vrot.slane %v726, 1
        %v728 = vmax.f32 %v726, %v727
        %vm737 = vcmask 1041409
        %v738 = vsel %vm737, %v692, %v686
        %vm739 = vcmask 1042434
        %v740 = vsel %vm739, %v698, %v738
        %vm741 = vcmask 1043459
        %v742 = vsel %vm741, %v704, %v740
        %vm743 = vcmask 1044484
        %v744 = vsel %vm743, %v710, %v742
        %vm745 = vcmask 1045509
        %v746 = vsel %vm745, %v716, %v744
        %vm747 = vcmask 1046534
        %v748 = vsel %vm747, %v722, %v746
        %vm749 = vcmask 1047559
        %v750 = vsel %vm749, %v728, %v748
        %v752 = vmax.f32 %v671, %v750
        %753 = vst [vmem:[#allocation2] sm:$0xff] %v752
        // Predicated region
        $region49: #{tpu_custom_call.1} parent=43 // pred_check
          %p754 = pneg %p298
        $region50: #{tpu_custom_call.1} parent=43 // pred_check_branch
          %756 = sbr.rel (%p754) target = $region52
        $region51: #{tpu_custom_call.1} parent=43 // pred_region
          %v757 = vld [vmem:[#allocation2] sm:$0xff]
          %v758 = vld [vmem:[%s2] sm:$0x1]
          %v760 = vperm.slane %v758, 0
          %v762 = vadd.f32 %v757, %v760
          %v763 = vmax.f32 %v762, 0.0
          %v764 = vld [vmem:[%s4] sm:$0xff]
          %v765 = vld [vmem:[%s4 + $0x8] sm:$0xff]
          %v766 = vld [vmem:[%s4 + $0x10] sm:$0xff]
          %v767 = vld [vmem:[%s4 + $0x18] sm:$0xff]
          %v768 = vld [vmem:[%s4 + $0x20] sm:$0xff]
          %v769 = vld [vmem:[%s4 + $0x28] sm:$0xff]
          %v770 = vld [vmem:[%s4 + $0x30] sm:$0xff]
          %v771 = vld [vmem:[%s4 + $0x38] sm:$0xff]
          %v772 = vld [vmem:[%s4 + $0x40] sm:$0xff]
          %v773 = vld [vmem:[%s4 + $0x48] sm:$0xff]
          %v774 = vld [vmem:[%s4 + $0x50] sm:$0xff]
          %v775 = vld [vmem:[%s4 + $0x58] sm:$0xff]
          %v776 = vld [vmem:[%s4 + $0x60] sm:$0xff]
          %v777 = vld [vmem:[%s4 + $0x68] sm:$0xff]
          %v778 = vld [vmem:[%s4 + $0x70] sm:$0xff]
          %v779 = vld [vmem:[%s4 + $0x78] sm:$0xff]
          %v780 = vld [vmem:[%s5] sm:$0x1]
          %v782 = vperm.slane %v780, 0
          %784 = vmatpush.msra.mxu0 %v779
          %785 = vmatpush.msra.mxu0 %v778
          %786 = vmatpush.msra.mxu0 %v777
          %787 = vmatpush.msra.mxu0 %v776
          %788 = vmatpush.msra.mxu0 %v775
          %789 = vmatpush.msra.mxu0 %v774
          %790 = vmatpush.msra.mxu0 %v773
          %791 = vmatpush.msra.mxu0 %v772
          %792 = vmatpush.msra.mxu0 %v771
          %793 = vmatpush.msra.mxu0 %v770
          %794 = vmatpush.msra.mxu0 %v769
          %795 = vmatpush.msra.mxu0 %v768
          %796 = vmatpush.msra.mxu0 %v767
          %797 = vmatpush.msra.mxu0 %v766
          %798 = vmatpush.msra.mxu0 %v765
          %799 = vmatpush.msra.mxu0 %v764
          %800 = vmatmul.f32.gmra.mxu0 %v763
          %v801 = vpop.f32.mrf.mxu0
          %v802 = vadd.f32 %v782, %v801
          %803 = vdwg.mxu0
          %v804 = vlaneseq
          %v805 = vand.u32 %v804, 127
          %vm806 = vcmp.lt.s32.totalorder %v805, 36
          %v807 = vsel %vm806, %v802, -1e+30
          %808 = vmax.xlane.f32.xlu0 %v807
          %v809 = vpop.xlane.xlu0 %808
          %v810 = vsub.f32 %v807, %v809
          %v811 = vmul.f32 %v810, 1.442695
          %v812 = vpow.pop %v811
          %813 = vadd.xlane.f32.xlu0 %v812
          %v814 = vpop.xlane.xlu0 %813
          %v815 = vlog2.pop %v814
          %v816 = vmul.f32 %v815, 0.6931472
          %v817 = vsub.f32 %v810, %v816
          %818 = vst [vmem:[%s282] sm:$0xff] %v817
        $region52: #{tpu_custom_call.1} parent=43 // pred_fallthru
          _
        %s819 = sand.u32 %s178, 1
        %s820 = scalar_lea.sflag [#allocation4], %s819
        %s821 = sand.u32 %s178, 1
        %s822 = smul.addr %s821, 8
        %s823 = scalar_lea.vmem [#allocation3], %s822
        // Predicated region
        $region53: #{tpu_custom_call.1} parent=43 // pred_check
          %p824 = pneg %p188
        $region54: #{tpu_custom_call.1} parent=43 // pred_check_branch
          %826 = sbr.rel (%p824) target = $region56
        $region55: #{tpu_custom_call.1} parent=43 // pred_region
          %828 = vsyncadd %s820, 0
          %s829 = smul.addr %s24, 8
          %s830 = scalar_lea.hbm %s6, %s829
          %s832 = sshll.u32 %s823, 4
          %s833 = int_to_ptr.vmem [resolvable:$true] %s832
          %s834 = sshll.u32 %s830, 4
          %s835 = int_to_ptr.hbm [resolvable:$true] %s834
          %837 = dma.vmem_to_hbm [thread:$0]  %s833, 128, %s835, %s820
        $region56: #{tpu_custom_call.1} parent=43 // pred_fallthru
          _
      $region44: #{tpu_custom_call.1} parent=5 // pred_fallthru
        _
      %p838 = scmp.le.s32.totalorder 2, %s15
      // Predicated region
      $region57: #{tpu_custom_call.1} parent=5 // pred_check
        %p839 = pneg %p838
      $region58: #{tpu_custom_call.1} parent=5 // pred_check_branch
        %841 = sbr.rel (%p839) target = $region60
      $region59: #{tpu_custom_call.1} parent=5 // pred_region
        %s842 = ssub.s32 %s15, 2
        // Predicated region
        $region61: #{tpu_custom_call.1} parent=59 // pred_check
          %p843 = pneg %p194
        $region62: #{tpu_custom_call.1} parent=59 // pred_check_branch
          %845 = sbr.rel (%p843) target = $region64
        $region63: #{tpu_custom_call.1} parent=59 // pred_region
          %s846 = sand.u32 %s179, 1
          %s847 = scalar_lea.sflag [#allocation4], %s846
          %s848 = sand.u32 %s179, 1
          %s849 = smul.addr %s848, 8
          %s850 = scalar_lea.vmem [#allocation3], %s849
          %852 = dma.done %s847, 128
        $region64: #{tpu_custom_call.1} parent=59 // pred_fallthru
          _
      $region60: #{tpu_custom_call.1} parent=5 // pred_fallthru
        _
    $region6: #{tpu_custom_call.1} parent=1 // loop_footer
      %s19 = sadd.s32 1, %s15
    $region7: #{tpu_custom_call.1} parent=1 // loop_footer_branch
      %14 = sbr.rel target = $region3
    $region8: #{tpu_custom_call.1} parent=1 // loop_exit
      _
    %853 = vsyncpa [#allocation4], 1
    %s854 = scalar_lea.sflag [#allocation4], 1
    %855 = vsyncpa %s854, 1

</llo_original>
